<compile_context>
chip_gen: v6e
topology: v6e:2x2x1
jax: 0.10.0
libtpu: 0.0.40
codegen_flags: <defaults>
</compile_context>

<pallas_src>
import math

import jax
import jax.numpy as jnp
from jax.experimental import pallas as pl
from jax.experimental.pallas import tpu as pltpu


# ---------------------------------------------------------------------------
# Pallas kernel: one token tile of the fused MoScale forward
# ---------------------------------------------------------------------------
def moscale_kernel(x_ref, w_ref, wt_ref, o_ref):
    # x_ref  : (T_tile, dim)  token tile, compute dtype (e.g. bf16)
    # w_ref  : (dim, rank)    pre-scaled w   (VMEM-resident, constant index_map)
    # wt_ref : (rank, dim)    pre-scaled w^T (VMEM-resident, constant index_map)
    # o_ref  : (T_tile, dim)  output tile (lane-dense: full `dim` on lanes)

    # logits = x @ w -> (T_tile, rank)   [MXU, native bf16 feed, f32 accumulate]
    logits = jnp.dot(x_ref[...], w_ref[...], preferred_element_type=jnp.float32)

    # numerically stable softmax over the rank axis (f32; XLU reduce + EUP exp)
    m = jnp.max(logits, axis=-1, keepdims=True)
    e = jnp.exp(logits - m)
    denom = jnp.sum(e, axis=-1, keepdims=True)
    probs = e * pl.reciprocal(denom, approx=True)        # divide -> EUP slot

    # out = probs @ w.T -> (T_tile, dim)   [MXU, bf16 feed, f32 accumulate]
    out = jnp.dot(probs.astype(wt_ref.dtype), wt_ref[...],
                  preferred_element_type=jnp.float32)

    # cast fused directly into the lane-dense store (single vst path on v5e)
    o_ref[...] = out.astype(o_ref.dtype)


# ---------------------------------------------------------------------------
# Tile selection: dim-aware, VMEM-safe (v7x 64 MiB), >=2 grid steps if possible
# ---------------------------------------------------------------------------
def _choose_token_tile(n_tok, dim, itemsize, max_token_tile):
    sub = max(8, 32 // max(itemsize, 1))          # sublane align: 8 f32, 16 bf16
    vmem_budget = 40 << 20                        # keep well under v7x 64 MiB
    # per-row bytes: double-buffered in + out tiles + ~f32 intermediates
    bytes_per_row = dim * (4 * itemsize + 8)
    cap_vmem = max(sub, vmem_budget // max(bytes_per_row, 1))
    t = min(n_tok, max_token_tile, cap_vmem)
    # ensure >= 2 grid steps when there is enough work (v7x megacore sharding)
    if t >= n_tok and n_tok >= 4 * sub:
        t = n_tok // 2
    if t < n_tok:
        if t >= 128:
            t = (t // 128) * 128                  # clean MXU M-tiling
        else:
            t = max(sub, (t // sub) * sub)
        t = min(t, n_tok)
    else:
        t = n_tok
    return t


# ---------------------------------------------------------------------------
# Wrapper (forward pass)
# ---------------------------------------------------------------------------
def moscale_forward(x, s, *, init=0.05, max_token_tile=2048):
    """x: [..., dim] (leading dims are batch/seq), s: [dim, rank]."""
    *lead, dim = x.shape
    d_s, rank = s.shape
    assert d_s == dim and rank < dim

    scale = 1.0 / math.sqrt(dim)
    w_gain = init / scale                         # fold w = s * (init/scale)

    compute_dtype = x.dtype
    w_full = s.astype(jnp.float32) * w_gain       # tiny [dim, rank] op (once)
    w_c = w_full.astype(compute_dtype)            # (dim, rank)  for x @ w
    wt_c = w_full.T.astype(compute_dtype)         # (rank, dim)  for probs @ w.T

    n_tok = math.prod(lead) if lead else 1
    x2 = x.reshape(n_tok, dim)                    # contiguous reshape, no copy

    itemsize = jnp.dtype(compute_dtype).itemsize
    t_tile = _choose_token_tile(n_tok, dim, itemsize, max_token_tile)
    grid = (pl.cdiv(n_tok, t_tile),)

    # VMEM budget from the actual resident buffers (+30% headroom), v7x-safe cap.
    tile_bytes = t_tile * dim * itemsize
    io_bytes = 2 * 2 * tile_bytes                             # 2-buffered in + out
    param_bytes = 2 * (dim * 128 + 16 * dim) * itemsize       # padded w + wT
    interm_bytes = t_tile * dim * 4 + 3 * t_tile * 128 * 4    # f32 out + softmax tmp
    vmem_bytes = int(1.3 * (io_bytes + param_bytes + interm_bytes)) + (2 << 20)
    vmem_bytes = max(16 << 20, min(vmem_bytes, 48 << 20))

    out = pl.pallas_call(
        moscale_kernel,
        out_shape=jax.ShapeDtypeStruct((n_tok, dim), x.dtype),
        grid_spec=pltpu.PrefetchScalarGridSpec(
            num_scalar_prefetch=0,
            grid=grid,
            in_specs=[
                pl.BlockSpec((t_tile, dim), lambda i: (i, 0)),   # x tile
                pl.BlockSpec((dim, rank), lambda i: (0, 0)),     # w   (resident)
                pl.BlockSpec((rank, dim), lambda i: (0, 0)),     # w^T (resident)
            ],
            out_specs=pl.BlockSpec((t_tile, dim), lambda i: (i, 0)),
        ),
        compiler_params=pltpu.CompilerParams(
            dimension_semantics=("parallel",),
            vmem_limit_bytes=vmem_bytes,
        ),
    )(x2, w_c, wt_c)

    return out.reshape(*lead, dim)


# ---------------------------------------------------------------------------
# Pure-JAX reference (mirrors the PyTorch forward exactly)
# ---------------------------------------------------------------------------
def moscale_reference(x, s, *, init=0.05):
    dim = x.shape[-1]
    scale = 1.0 / math.sqrt(dim)
    w = s.astype(jnp.float32) * (init / scale)                     # [dim, rank]
    logits = jnp.einsum("...d,dr->...r", x.astype(jnp.float32), w)
    probs = jax.nn.softmax(logits, axis=-1)                        # [..., rank]
    out = jnp.einsum("...r,dr->...d", probs, w)                    # [..., dim]
    return out.astype(x.dtype)


if __name__ == "__main__":
    key = jax.random.PRNGKey(0)
    kx1, ks1, kx2, ks2 = jax.random.split(key, 4)

    # Case 1: small shapes consistent with the module (batch=2, seq=8, dim=32, rank=4)
    B, T, DIM, RANK = 2, 8, 32, 4
    x1 = jax.random.normal(kx1, (B, T, DIM), dtype=jnp.float32).astype(jnp.bfloat16)
    scale1 = 1.0 / math.sqrt(DIM)
    s1 = (jnp.ones((DIM, RANK), jnp.float32)
          + 0.1 * jax.random.normal(ks1, (DIM, RANK), jnp.float32)) * (scale1 / RANK)

    out1 = jax.block_until_ready(moscale_forward(x1, s1))
    ref1 = moscale_reference(x1, s1)
    assert out1.shape == x1.shape and out1.dtype == x1.dtype
    assert jnp.allclose(out1.astype(jnp.float32), ref1.astype(jnp.float32),
                        atol=1e-2, rtol=1e-2), "MoScale mismatch (case 1)"

    # Case 2: f32 input exercising the multi-step (>=2) token grid path.
    B2, T2, DIM2, RANK2 = 4, 64, 128, 8
    x2 = jax.random.normal(kx2, (B2, T2, DIM2), dtype=jnp.float32)
    scale2 = 1.0 / math.sqrt(DIM2)
    s2 = (jnp.ones((DIM2, RANK2), jnp.float32)
          + 0.1 * jax.random.normal(ks2, (DIM2, RANK2), jnp.float32)) * (scale2 / RANK2)

    out2 = jax.block_until_ready(moscale_forward(x2, s2))
    ref2 = moscale_reference(x2, s2)
    assert out2.shape == x2.shape and out2.dtype == x2.dtype
    assert jnp.allclose(out2, ref2, atol=1e-2, rtol=1e-2), "MoScale mismatch (case 2)"

    print("KERNEL_OK")
</pallas_src>

<mosaic_0001>
module attributes {stable_mosaic.version = 11 : i64} {
  func.func @moscale_kernel(%arg0: i32, %arg1: memref<16x32xbf16, #tpu.memory_space<vmem>>, %arg2: memref<32x4xbf16, #tpu.memory_space<vmem>>, %arg3: memref<4x32xbf16, #tpu.memory_space<vmem>>, %arg4: memref<16x32xbf16, #tpu.memory_space<vmem>>) attributes {dimension_semantics = [#tpu.dimension_semantics<parallel>], iteration_bounds = array<i64: 1>, scalar_prefetch = 0 : i64, scratch_operands = 0 : i64, tpu.core_type = #tpu.core_type<tc>, window_params = [{transform_indices = @transform_0, window_bounds = array<i64: 16, 32>}, {pipeline_mode = #tpu.pipeline_mode<synchronous>, transform_indices = @transform_1, window_bounds = array<i64: 32, 4>}, {pipeline_mode = #tpu.pipeline_mode<synchronous>, transform_indices = @transform_2, window_bounds = array<i64: 4, 32>}, {transform_indices = @transform_3, window_bounds = array<i64: 16, 32>}]} {
    %c0 = arith.constant 0 : index
    %c0_0 = arith.constant 0 : index
    %0 = vector.load %arg1[%c0, %c0_0] : memref<16x32xbf16, #tpu.memory_space<vmem>>, vector<16x32xbf16>
    %c0_1 = arith.constant 0 : index
    %c0_2 = arith.constant 0 : index
    %1 = vector.load %arg2[%c0_1, %c0_2] : memref<32x4xbf16, #tpu.memory_space<vmem>>, vector<32x4xbf16>
    %cst = arith.constant dense<0.000000e+00> : vector<16x4xf32>
    %2 = tpu.matmul %0, %1, %cst {dimension_numbers = #tpu.dot_dimension_numbers<[1], [0], [0], [1], [0, 0, 1, 1], [], []>} : vector<16x32xbf16>, vector<32x4xbf16>, vector<16x4xf32> -> vector<16x4xf32>
    %cst_3 = arith.constant dense<0xFF800000> : vector<16xf32>
    %3 = vector.multi_reduction <maximumf>, %2, %cst_3 [1] : vector<16x4xf32> to vector<16xf32>
    %4 = vector.shape_cast %3 : vector<16xf32> to vector<16x1xf32>
    %5 = vector.broadcast %4 : vector<16x1xf32> to vector<16x4xf32>
    %6 = arith.subf %2, %5 : vector<16x4xf32>
    %7 = math.exp %6 : vector<16x4xf32>
    %cst_4 = arith.constant dense<0.000000e+00> : vector<16xf32>
    %8 = vector.multi_reduction <add>, %7, %cst_4 [1] : vector<16x4xf32> to vector<16xf32>
    %9 = vector.shape_cast %8 : vector<16xf32> to vector<16x1xf32>
    %10 = tpu.reciprocal %9 {approx = true} : vector<16x1xf32> -> vector<16x1xf32>
    %11 = vector.broadcast %10 : vector<16x1xf32> to vector<16x4xf32>
    %12 = arith.mulf %7, %11 : vector<16x4xf32>
    %13 = arith.truncf %12 : vector<16x4xf32> to vector<16x4xbf16>
    %c0_5 = arith.constant 0 : index
    %c0_6 = arith.constant 0 : index
    %14 = vector.load %arg3[%c0_5, %c0_6] : memref<4x32xbf16, #tpu.memory_space<vmem>>, vector<4x32xbf16>
    %cst_7 = arith.constant dense<0.000000e+00> : vector<16x32xf32>
    %15 = tpu.matmul %13, %14, %cst_7 {dimension_numbers = #tpu.dot_dimension_numbers<[1], [0], [0], [1], [0, 0, 1, 1], [], []>} : vector<16x4xbf16>, vector<4x32xbf16>, vector<16x32xf32> -> vector<16x32xf32>
    %16 = arith.truncf %15 : vector<16x32xf32> to vector<16x32xbf16>
    %c0_8 = arith.constant 0 : index
    %c0_9 = arith.constant 0 : index
    %17 = vector.load %arg4[%c0_8, %c0_9] : memref<16x32xbf16, #tpu.memory_space<vmem>>, vector<16x32xbf16>
    tpu.vector_store %arg4[%c0_8, %c0_9], %16 {strides = array<i32>} : memref<16x32xbf16, #tpu.memory_space<vmem>>, vector<16x32xbf16>,
    return
  }
  func.func @transform_0(%arg0: i32) -> (i32, i32) {
    %c0_i32 = arith.constant 0 : i32
    %c0_i32_0 = arith.constant 0 : i32
    return %arg0, %c0_i32 : i32, i32
  }
  func.func @transform_1(%arg0: i32) -> (i32, i32) {
    %c0_i32 = arith.constant 0 : i32
    %c0_i32_0 = arith.constant 0 : i32
    %c0_i32_1 = arith.constant 0 : i32
    return %c0_i32, %c0_i32_0 : i32, i32
  }
  func.func @transform_2(%arg0: i32) -> (i32, i32) {
    %c0_i32 = arith.constant 0 : i32
    %c0_i32_0 = arith.constant 0 : i32
    %c0_i32_1 = arith.constant 0 : i32
    return %c0_i32, %c0_i32_0 : i32, i32
  }
  func.func @transform_3(%arg0: i32) -> (i32, i32) {
    %c0_i32 = arith.constant 0 : i32
    %c0_i32_0 = arith.constant 0 : i32
    return %arg0, %c0_i32 : i32, i32
  }
}

</mosaic_0001>

<llo_original>
// kernel: tpu_custom_call.1
$region0: #{tpu_custom_call.1}
  #allocation0 [shape = 'u32[]', space=smem, size = 0x4, offset = 0x4, fixed_abs, tag = 'smem constant byte address 0x4 - core index']
  #allocation1 [shape = 'u32[144,128]{1,0:T(1,128)}', space=vmem, size = 0x12000, scoped, tag = 'internal scratch']
  %s0 = inlined_call_operand.vmem [shape: bf16[16,32], index: 0, kind: input, shape index: {}]
  %s1 = inlined_call_operand.vmem [shape: bf16[32,4], index: 1, kind: input, shape index: {}]
  %s2 = inlined_call_operand.vmem [shape: bf16[4,32], index: 2, kind: input, shape index: {}]
  %s3 = inlined_call_operand.hbm [shape: bf16[16,32], index: 3, kind: output, shape index: {}]
  %s4 = sld [smem:[#allocation0]]
  $region22: #{tpu_custom_call.1} parent=0
    _
  %s6 = ssub.s32 1, %s4
  %s7 = scalar_select 0, %s6, %s4
  $region1: #{tpu_custom_call.1} parent=0
    #allocation2 [shape = 'u8[4096]{0}', space=vmem, size = 0x1000, scoped, tag = 'output window, operand 0, single buffered']
    #allocation3 [shape = 's32[1]{0}', space=sflag, size = 0x4, scoped, tag = 'scoped memory for tpu_custom_call.1']
    %8 = vsyncpa [#allocation3], 0
    // Predicated region
    $region2: #{tpu_custom_call.1} parent=1 // pred_check
      _
    $region3: #{tpu_custom_call.1} parent=1 // pred_check_branch
      %10 = sbr.rel (0) target = $region5
    $region4: #{tpu_custom_call.1} parent=1 // pred_region
      _
    $region5: #{tpu_custom_call.1} parent=1 // pred_fallthru
      _
    // Predicated region
    $region6: #{tpu_custom_call.1} parent=1 // pred_check
      _
    $region7: #{tpu_custom_call.1} parent=1 // pred_check_branch
      %12 = sbr.rel (0) target = $region9
    $region8: #{tpu_custom_call.1} parent=1 // pred_region
      _
    $region9: #{tpu_custom_call.1} parent=1 // pred_fallthru
      _
    // Predicated region
    $region10: #{tpu_custom_call.1} parent=1 // pred_check
      _
    $region11: #{tpu_custom_call.1} parent=1 // pred_check_branch
      %14 = sbr.rel (0) target = $region13
    $region12: #{tpu_custom_call.1} parent=1 // pred_region
      _
    $region13: #{tpu_custom_call.1} parent=1 // pred_fallthru
      _
    %v16 = vld [vmem:[%s0] sm:$0xf]
    %v17 = vld [vmem:[%s0 + $0x4] sm:$0xf]
    %v18 = vld [vmem:[%s1] sm:$0xf]
    %v19 = vld [vmem:[%s1 + $0x4] sm:$0xf]
    %v20 = vld [vmem:[%s1 + $0x8] sm:$0xf]
    %v21 = vld [vmem:[%s1 + $0xc] sm:$0xf]
    %v24 = vunpack.c.l.b16 %v16
    %v25 = vunpack.c.l.b16 %v17
    %v26 = vpack.c.b16 %v25, %v24
    %v31 = vunpack.c.l.b16 %v18
    %v32 = vunpack.c.l.b16 %v19
    %v33 = vunpack.c.l.b16 %v20
    %v34 = vunpack.c.l.b16 %v21
    %v35 = vpack.c.b16 %v32, %v31
    %v36 = vpack.c.b16 %v34, %v33
    %vm39 = vcmask 261120
    %v41 = vsel %vm39, %v26, 0
    %43 = vmatprep.subr.bf16.mxu0 0
    %44 = vmatpush1.bf16.msra.mxu0 0
    %45 = vmatprep.subr.bf16.mxu0 0
    %46 = vmatpush1.bf16.msra.mxu0 0
    %47 = vmatprep.subr.bf16.mxu0 0
    %48 = vmatpush1.bf16.msra.mxu0 0
    %49 = vmatprep.subr.bf16.mxu0 0
    %50 = vmatpush1.bf16.msra.mxu0 0
    %51 = vmatprep.subr.bf16.mxu0 0
    %52 = vmatpush1.bf16.msra.mxu0 0
    %53 = vmatprep.subr.bf16.mxu0 0
    %54 = vmatpush1.bf16.msra.mxu0 0
    %55 = vmatprep.subr.bf16.mxu0 0
    %56 = vmatpush1.bf16.msra.mxu0 %v36
    %57 = vmatprep.subr.bf16.mxu0 0
    %58 = vmatpush1.bf16.msra.mxu0 %v35
    %59 = vmatprep.subr.bf16.mxu0 0
    %60 = vmatpush2.bf16.msra.mxu0 0
    %61 = vmatprep.subr.bf16.mxu0 0
    %62 = vmatpush2.bf16.msra.mxu0 0
    %63 = vmatprep.subr.bf16.mxu0 0
    %64 = vmatpush2.bf16.msra.mxu0 0
    %65 = vmatprep.subr.bf16.mxu0 0
    %66 = vmatpush2.bf16.msra.mxu0 0
    %67 = vmatprep.subr.bf16.mxu0 0
    %68 = vmatpush2.bf16.msra.mxu0 0
    %69 = vmatprep.subr.bf16.mxu0 0
    %70 = vmatpush2.bf16.msra.mxu0 0
    %71 = vmatprep.subr.bf16.mxu0 0
    %72 = vmatpush2.bf16.msra.mxu0 0
    %73 = vmatprep.subr.bf16.mxu0 0
    %74 = vmatpush2.bf16.msra.mxu0 0
    %75 = vmatprep.mubr.bf16.mxu0 0
    %76 = vmatmul.mubr.bf16.gmra.mxu0 %v41
    %v77 = vpop.f32.mrf.mxu0
    %v78 = vadd.f32 0.0, %v77
    %v79 = vpop.f32.mrf.mxu0
    %v80 = vpop.f32.mrf.mxu0
    %v81 = vadd.f32 0.0, %v80
    %v82 = vpop.f32.mrf.mxu0
    %83 = vdwg.mxu0
    %vm84 = vcmask 31744
    %v85 = vsel %vm84, %v78, -inf
    %86 = vmax.xlane.f32.xlu0 %v85
    %v87 = vpop.xlane.xlu0 %86
    %v88 = vsel %vm84, %v81, -inf
    %89 = vmax.xlane.f32.xlu0 %v88
    %v90 = vpop.xlane.xlu0 %89
    %v91 = vsub.f32 %v78, %v87
    %v92 = vsub.f32 %v81, %v90
    %v93 = vmul.f32 %v91, 1.442695
    %v94 = vpow.pop %v93
    %v95 = vmul.f32 %v92, 1.442695
    %v96 = vpow.pop %v95
    %v97 = vsel %vm84, %v94, 0.0
    %98 = vadd.xlane.f32.xlu0 %v97
    %v99 = vpop.xlane.xlu0 %98
    %v100 = vsel %vm84, %v96, 0.0
    %101 = vadd.xlane.f32.xlu0 %v100
    %v102 = vpop.xlane.xlu0 %101
    %v103 = vrcp.pop %v99
    %v104 = vrcp.pop %v102
    %v105 = vmul.f32 %v94, %v103
    %v106 = vmul.f32 %v96, %v104
    %v107 = vpack.c.bf16 %v106, %v105
    %v108 = vld [vmem:[%s2] sm:$0x3]
    %v110 = vsel %vm84, %v107, 0
    %vm112 = vcmask 1041408
    %v114 = vsel %vm112, %v108, 0
    %116 = vmatprep.subr.bf16.mxu0 0
    %117 = vmatpush1.bf16.msra.mxu0 0
    %118 = vmatprep.subr.bf16.mxu0 0
    %119 = vmatpush1.bf16.msra.mxu0 0
    %120 = vmatprep.subr.bf16.mxu0 0
    %121 = vmatpush1.bf16.msra.mxu0 0
    %122 = vmatprep.subr.bf16.mxu0 0
    %123 = vmatpush1.bf16.msra.mxu0 0
    %124 = vmatprep.subr.bf16.mxu0 0
    %125 = vmatpush1.bf16.msra.mxu0 0
    %126 = vmatprep.subr.bf16.mxu0 0
    %127 = vmatpush1.bf16.msra.mxu0 0
    %128 = vmatprep.subr.bf16.mxu0 0
    %129 = vmatpush1.bf16.msra.mxu0 0
    %130 = vmatprep.subr.bf16.mxu0 0
    %131 = vmatpush1.bf16.msra.mxu0 %v114
    %132 = vmatprep.subr.bf16.mxu0 0
    %133 = vmatpush2.bf16.msra.mxu0 0
    %134 = vmatprep.subr.bf16.mxu0 0
    %135 = vmatpush2.bf16.msra.mxu0 0
    %136 = vmatprep.subr.bf16.mxu0 0
    %137 = vmatpush2.bf16.msra.mxu0 0
    %138 = vmatprep.subr.bf16.mxu0 0
    %139 = vmatpush2.bf16.msra.mxu0 0
    %140 = vmatprep.subr.bf16.mxu0 0
    %141 = vmatpush2.bf16.msra.mxu0 0
    %142 = vmatprep.subr.bf16.mxu0 0
    %143 = vmatpush2.bf16.msra.mxu0 0
    %144 = vmatprep.subr.bf16.mxu0 0
    %145 = vmatpush2.bf16.msra.mxu0 0
    %146 = vmatprep.subr.bf16.mxu0 0
    %147 = vmatpush2.bf16.msra.mxu0 0
    %148 = vmatprep.mubr.bf16.mxu0 0
    %149 = vmatmul.mubr.bf16.gmra.mxu0 %v110
    %v150 = vpop.f32.mrf.mxu0
    %v151 = vadd.f32 0.0, %v150
    %v152 = vpop.f32.mrf.mxu0
    %v153 = vpop.f32.mrf.mxu0
    %v154 = vadd.f32 0.0, %v153
    %v155 = vpop.f32.mrf.mxu0
    %156 = vdwg.mxu0
    %v157 = vpack.c.bf16 %v154, %v151
    %v159 = vunpack.c.l.b16 %v157
    %v160 = vunpack.c.h.b16 %v157
    %v161 = vpack.c.b16 %v159, %v159
    %v162 = vpack.c.b16 %v160, %v160
    %vm165 = vcmask 257024
    %166 = vst.msk [vmem:[#allocation2] sm:$0xf] %vm165, %v161
    %167 = vst.msk [vmem:[#allocation2 + $0x4] sm:$0xf] %vm165, %v162
    // Predicated region
    $region14: #{tpu_custom_call.1} parent=1 // pred_check
      _
    $region15: #{tpu_custom_call.1} parent=1 // pred_check_branch
      %169 = sbr.rel (0) target = $region17
    $region16: #{tpu_custom_call.1} parent=1 // pred_region
      %s171 = ssub.s32 128, 128
      %172 = vsyncadd [#allocation3], %s171
      %s173 = sshll.u32 [#allocation2], 4
      %s174 = int_to_ptr.vmem [resolvable:$true] %s173
      %179 = dma.vmem_to_hbm [thread:$0]  %s174, 128, %s3, [#allocation3], 64, 64, 4
    $region17: #{tpu_custom_call.1} parent=1 // pred_fallthru
      _
    // Predicated region
    $region18: #{tpu_custom_call.1} parent=1 // pred_check
      _
    $region19: #{tpu_custom_call.1} parent=1 // pred_check_branch
      %181 = sbr.rel (0) target = $region21
    $region20: #{tpu_custom_call.1} parent=1 // pred_region
      %182 = dma.done [#allocation3], 128
    $region21: #{tpu_custom_call.1} parent=1 // pred_fallthru
      _
    %183 = vsyncpa [#allocation3], 1

</llo_original>
